<compile_context>
chip_gen: v5e
topology: v5e:2x2
jax: 0.10.0
libtpu: 0.0.40
codegen_flags: <defaults>
</compile_context>

<pallas_src>
import functools

import jax
import jax.numpy as jnp
import numpy as np
from jax import lax
from jax.experimental import pallas as pl
from jax.experimental.pallas import tpu as pltpu


def _round_up(x, m):
    return ((x + m - 1) // m) * m


def _pick_s3_chunk(n):
    for c in (256, 128, 64, 32, 16, 8):
        if n % c == 0:
            return c
    return n


def struc2vec_kernel(xv_ref, ws_ref,
                     w1a_ref, b1a_ref, w1b_ref, b1b_ref,
                     w2_ref, b2_ref, w3_ref, b3_ref, w4_ref, b4_ref,
                     mu_ref, *, T, s3_chunk):
    Bt, N, node_dim = xv_ref.shape
    emb = mu_ref.shape[2]                 # lane-padded embedding width
    BtN = Bt * N

    if T == 0:
        # PyTorch loop body never runs: mu stays zero.
        mu_ref[...] = jnp.zeros((Bt, N, emb), jnp.float32)
        return

    # ---- node-wise input, flattened so matmuls see a tall M dimension -----
    xv = xv_ref[...].reshape(BtN, node_dim)                   # (Bt*N, node_dim)

    w1a = w1a_ref[...]; b1a = b1a_ref[...]
    w1b = w1b_ref[...]; b1b = b1b_ref[...]
    w2 = w2_ref[...];   b2 = b2_ref[...]
    w3 = w3_ref[...];   b3 = b3_ref[...]

    # s1 = theta1b(relu(theta1a(xv)))                          (Bt*N, emb)
    h = jnp.maximum(
        jnp.dot(xv, w1a, preferred_element_type=jnp.float32) + b1a, 0.0)
    s1 = jnp.dot(h, w1b, preferred_element_type=jnp.float32) + b1b

    # s3_2[b, j, e] = sum_i relu(Ws[b, i, j] * w4[e] + b4[e])
    # Chunked over i so the (N, N, emb) intermediate is never materialised.
    w4b = w4_ref[...].reshape(1, 1, 1, emb)
    b4b = b4_ref[...].reshape(1, 1, 1, emb)
    n_chunks = N // s3_chunk

    def s3_chunk_sum(chunk):
        t = jnp.maximum(chunk[..., None] * w4b + b4b, 0.0)    # (Bt, CK, N, emb)
        return jnp.sum(t, axis=1)                             # (Bt, N, emb)

    if n_chunks == 1:
        s3_2 = s3_chunk_sum(ws_ref[...])
    else:
        def s3_body(c, acc):
            i0 = pl.multiple_of(c * s3_chunk, s3_chunk)
            chunk = ws_ref[:, pl.ds(i0, s3_chunk), :]         # (Bt, CK, N)
            return acc + s3_chunk_sum(chunk)

        s3_2 = lax.fori_loop(0, n_chunks, s3_body,
                             jnp.zeros((Bt, N, emb), jnp.float32))

    s3 = jnp.dot(s3_2.reshape(BtN, emb), w3,
                 preferred_element_type=jnp.float32) + b3     # (Bt*N, emb)

    # Hoist the loop-invariant part of the recursion (incl. theta2 bias).
    s13 = s1 + s3 + b2                                        # (Bt*N, emb)

    ws = ws_ref[...]                                          # (Bt, N, N)

    def t_body(_, mu_flat):
        mu3 = mu_flat.reshape(Bt, N, emb)
        agg = jnp.einsum('bij,bje->bie', ws, mu3,
                         preferred_element_type=jnp.float32)  # (Bt, N, emb)
        s2 = jnp.dot(agg.reshape(BtN, emb), w2,
                     preferred_element_type=jnp.float32)      # (Bt*N, emb)
        return jnp.maximum(s13 + s2, 0.0)

    # Peel iteration 0: mu starts at zero so Ws@mu == 0 and mu_1 = relu(s13).
    mu0 = jnp.maximum(s13, 0.0)
    if T == 1:
        mu_flat = mu0
    else:
        mu_flat = lax.fori_loop(0, T - 1, t_body, mu0, unroll=(T <= 8))

    mu_ref[...] = mu_flat.reshape(Bt, N, emb)


def _pad_to(a, rows, cols):
    pr, pc = rows - a.shape[0], cols - a.shape[1]
    if pr == 0 and pc == 0:
        return a
    return jnp.pad(a, ((0, pr), (0, pc)))


def _choose_bt(B, N, node_dim, emb_p, s3_chunk, budget_bytes):
    # Rough per-batch VMEM cost: double-buffered xv/Ws/out blocks plus the
    # dominant in-kernel temporaries (s1, s3, s13, mu, agg, s2, s3 acc, and
    # the (CK, N, emb) chunk).
    per_batch = 4 * (2 * (N * node_dim + N * N + N * emb_p)
                     + 7 * N * emb_p
                     + s3_chunk * N * emb_p)
    best = 1
    for bt in range(1, B + 1):
        if B % bt == 0 and bt * per_batch <= budget_bytes:
            best = bt
    return best


def struc2vec_forward(xv, Ws, params, T, *, vmem_budget_bytes=40 * 1024 * 1024):
    B, N, node_dim = xv.shape
    emb = params["w1a"].shape[1]
    emb_p = _round_up(emb, 128)            # lane-dense embedding width
    s3_chunk = _pick_s3_chunk(N)
    Bt = _choose_bt(B, N, node_dim, emb_p, s3_chunk, vmem_budget_bytes)

    # Zero-pad all weights/biases to emb_p columns (and rows where the input
    # of the Linear is the embedding).  Padded output columns are provably
    # zero through every relu, so slicing back to emb is lossless.
    w1a = _pad_to(params["w1a"], node_dim, emb_p)
    b1a = _pad_to(params["b1a"], 1, emb_p)
    w1b = _pad_to(params["w1b"], emb_p, emb_p)
    b1b = _pad_to(params["b1b"], 1, emb_p)
    w2 = _pad_to(params["w2"], emb_p, emb_p)
    b2 = _pad_to(params["b2"], 1, emb_p)
    w3 = _pad_to(params["w3"], emb_p, emb_p)
    b3 = _pad_to(params["b3"], 1, emb_p)
    w4 = _pad_to(params["w4"], 1, emb_p)
    b4 = _pad_to(params["b4"], 1, emb_p)
    weight_args = (w1a, b1a, w1b, b1b, w2, b2, w3, b3, w4, b4)

    def batch_map(i):
        return (i, 0, 0)

    def weight_map(i):
        return (0, 0)

    weight_specs = [pl.BlockSpec(w.shape, weight_map) for w in weight_args]

    grid_spec = pltpu.PrefetchScalarGridSpec(
        num_scalar_prefetch=0,
        grid=(B // Bt,),
        in_specs=[
            pl.BlockSpec((Bt, N, node_dim), batch_map),   # xv
            pl.BlockSpec((Bt, N, N), batch_map),          # Ws
        ] + weight_specs,
        out_specs=pl.BlockSpec((Bt, N, emb_p), batch_map),
    )

    kernel = functools.partial(struc2vec_kernel, T=T, s3_chunk=s3_chunk)
    mu_p = pl.pallas_call(
        kernel,
        out_shape=jax.ShapeDtypeStruct((B, N, emb_p), jnp.float32),
        grid_spec=grid_spec,
        compiler_params=pltpu.CompilerParams(
            dimension_semantics=("parallel",),
            vmem_limit_bytes=56 * 1024 * 1024),
    )(xv, Ws, *weight_args)
    return mu_p[:, :, :emb]


def struc2vec_reference(xv, Ws, params, T):
    """Pure-JAX reference matching the PyTorch forward (unpadded params)."""
    B, N, _ = xv.shape
    emb = params["w1a"].shape[1]
    h = jnp.maximum(xv @ params["w1a"] + params["b1a"][0], 0.0)
    s1 = h @ params["w1b"] + params["b1b"][0]
    s3_1 = jnp.maximum(Ws[..., None] * params["w4"][0] + params["b4"][0], 0.0)
    s3_2 = jnp.sum(s3_1, axis=1)
    s3 = s3_2 @ params["w3"] + params["b3"][0]
    mu = jnp.zeros((B, N, emb), jnp.float32)
    for _ in range(T):
        s2 = (Ws @ mu) @ params["w2"] + params["b2"][0]
        mu = jnp.maximum(s1 + s2 + s3, 0.0)
    return mu


def init_params(key, node_dim, emb_dim):
    """Deterministic synthetic init (PyTorch Linear weights pre-transposed)."""
    ks = jax.random.split(key, 10)

    def w(k, shape):
        return (jax.random.normal(k, shape, jnp.float32) * 0.1).astype(jnp.float32)

    return {
        "w1a": w(ks[0], (node_dim, emb_dim)), "b1a": w(ks[1], (1, emb_dim)),
        "w1b": w(ks[2], (emb_dim, emb_dim)),  "b1b": w(ks[3], (1, emb_dim)),
        "w2":  w(ks[4], (emb_dim, emb_dim)),  "b2":  w(ks[5], (1, emb_dim)),
        "w3":  w(ks[6], (emb_dim, emb_dim)),  "b3":  w(ks[7], (1, emb_dim)),
        "w4":  w(ks[8], (1, emb_dim)),        "b4":  w(ks[9], (1, emb_dim)),
    }


if __name__ == "__main__":
    B, N, node_dim, emb_dim, T = 2, 8, 4, 32, 3

    key = jax.random.PRNGKey(0)
    k_xv, k_ws, k_p = jax.random.split(key, 3)
    xv = jax.random.normal(k_xv, (B, N, node_dim), jnp.float32)
    # symmetric non-negative "adjacency"-like matrices
    Wraw = jax.random.uniform(k_ws, (B, N, N), jnp.float32)
    Ws = 0.5 * (Wraw + jnp.transpose(Wraw, (0, 2, 1)))

    params = init_params(k_p, node_dim, emb_dim)

    mu = struc2vec_forward(xv, Ws, params, T)
    mu = jax.block_until_ready(mu)

    mu_ref = struc2vec_reference(xv, Ws, params, T)
    np.testing.assert_allclose(np.asarray(mu), np.asarray(mu_ref),
                               rtol=1e-5, atol=1e-5)
    print("KERNEL_OK")
</pallas_src>

<mosaic_0001>
module attributes {stable_mosaic.version = 11 : i64} {
  func.func @struc2vec_kernel(%arg0: i32, %arg1: memref<2x8x4xf32, #tpu.memory_space<vmem>>, %arg2: memref<2x8x8xf32, #tpu.memory_space<vmem>>, %arg3: memref<4x128xf32, #tpu.memory_space<vmem>>, %arg4: memref<1x128xf32, #tpu.memory_space<vmem>>, %arg5: memref<128x128xf32, #tpu.memory_space<vmem>>, %arg6: memref<1x128xf32, #tpu.memory_space<vmem>>, %arg7: memref<128x128xf32, #tpu.memory_space<vmem>>, %arg8: memref<1x128xf32, #tpu.memory_space<vmem>>, %arg9: memref<128x128xf32, #tpu.memory_space<vmem>>, %arg10: memref<1x128xf32, #tpu.memory_space<vmem>>, %arg11: memref<1x128xf32, #tpu.memory_space<vmem>>, %arg12: memref<1x128xf32, #tpu.memory_space<vmem>>, %arg13: memref<2x8x128xf32, #tpu.memory_space<vmem>>) attributes {dimension_semantics = [#tpu.dimension_semantics<parallel>], iteration_bounds = array<i64: 1>, scalar_prefetch = 0 : i64, scratch_operands = 0 : i64, tpu.core_type = #tpu.core_type<tc>, window_params = [{transform_indices = @transform_0, window_bounds = array<i64: 2, 8, 4>}, {transform_indices = @transform_1, window_bounds = array<i64: 2, 8, 8>}, {pipeline_mode = #tpu.pipeline_mode<synchronous>, transform_indices = @transform_2, window_bounds = array<i64: 4, 128>}, {pipeline_mode = #tpu.pipeline_mode<synchronous>, transform_indices = @transform_3, window_bounds = array<i64: 1, 128>}, {pipeline_mode = #tpu.pipeline_mode<synchronous>, transform_indices = @transform_4, window_bounds = array<i64: 128, 128>}, {pipeline_mode = #tpu.pipeline_mode<synchronous>, transform_indices = @transform_5, window_bounds = array<i64: 1, 128>}, {pipeline_mode = #tpu.pipeline_mode<synchronous>, transform_indices = @transform_6, window_bounds = array<i64: 128, 128>}, {pipeline_mode = #tpu.pipeline_mode<synchronous>, transform_indices = @transform_7, window_bounds = array<i64: 1, 128>}, {pipeline_mode = #tpu.pipeline_mode<synchronous>, transform_indices = @transform_8, window_bounds = array<i64: 128, 128>}, {pipeline_mode = #tpu.pipeline_mode<synchronous>, transform_indices = @transform_9, window_bounds = array<i64: 1, 128>}, {pipeline_mode = #tpu.pipeline_mode<synchronous>, transform_indices = @transform_10, window_bounds = array<i64: 1, 128>}, {pipeline_mode = #tpu.pipeline_mode<synchronous>, transform_indices = @transform_11, window_bounds = array<i64: 1, 128>}, {transform_indices = @transform_12, window_bounds = array<i64: 2, 8, 128>}]} {
    %c0 = arith.constant 0 : index
    %c0_0 = arith.constant 0 : index
    %c0_1 = arith.constant 0 : index
    %0 = vector.load %arg1[%c0, %c0_0, %c0_1] : memref<2x8x4xf32, #tpu.memory_space<vmem>>, vector<2x8x4xf32>
    %1 = vector.shape_cast %0 : vector<2x8x4xf32> to vector<16x4xf32>
    %c0_2 = arith.constant 0 : index
    %c0_3 = arith.constant 0 : index
    %2 = vector.load %arg3[%c0_2, %c0_3] : memref<4x128xf32, #tpu.memory_space<vmem>>, vector<4x128xf32>
    %c0_4 = arith.constant 0 : index
    %c0_5 = arith.constant 0 : index
    %3 = vector.load %arg4[%c0_4, %c0_5] : memref<1x128xf32, #tpu.memory_space<vmem>>, vector<1x128xf32>
    %c0_6 = arith.constant 0 : index
    %c0_7 = arith.constant 0 : index
    %4 = vector.load %arg5[%c0_6, %c0_7] : memref<128x128xf32, #tpu.memory_space<vmem>>, vector<128x128xf32>
    %c0_8 = arith.constant 0 : index
    %c0_9 = arith.constant 0 : index
    %5 = vector.load %arg6[%c0_8, %c0_9] : memref<1x128xf32, #tpu.memory_space<vmem>>, vector<1x128xf32>
    %c0_10 = arith.constant 0 : index
    %c0_11 = arith.constant 0 : index
    %6 = vector.load %arg7[%c0_10, %c0_11] : memref<128x128xf32, #tpu.memory_space<vmem>>, vector<128x128xf32>
    %c0_12 = arith.constant 0 : index
    %c0_13 = arith.constant 0 : index
    %7 = vector.load %arg8[%c0_12, %c0_13] : memref<1x128xf32, #tpu.memory_space<vmem>>, vector<1x128xf32>
    %c0_14 = arith.constant 0 : index
    %c0_15 = arith.constant 0 : index
    %8 = vector.load %arg9[%c0_14, %c0_15] : memref<128x128xf32, #tpu.memory_space<vmem>>, vector<128x128xf32>
    %c0_16 = arith.constant 0 : index
    %c0_17 = arith.constant 0 : index
    %9 = vector.load %arg10[%c0_16, %c0_17] : memref<1x128xf32, #tpu.memory_space<vmem>>, vector<1x128xf32>
    %cst = arith.constant dense<0.000000e+00> : vector<16x128xf32>
    %10 = tpu.matmul %1, %2, %cst {dimension_numbers = #tpu.dot_dimension_numbers<[1], [0], [0], [1], [0, 0, 1, 1], [], []>} : vector<16x4xf32>, vector<4x128xf32>, vector<16x128xf32> -> vector<16x128xf32>
    %11 = vector.broadcast %3 : vector<1x128xf32> to vector<16x128xf32>
    %12 = arith.addf %10, %11 : vector<16x128xf32>
    %cst_18 = arith.constant 0.000000e+00 : f32
    %13 = vector.broadcast %cst_18 : f32 to vector<16x128xf32>
    %14 = arith.maximumf %12, %13 : vector<16x128xf32>
    %cst_19 = arith.constant dense<0.000000e+00> : vector<16x128xf32>
    %15 = tpu.matmul %14, %4, %cst_19 {dimension_numbers = #tpu.dot_dimension_numbers<[1], [0], [0], [1], [0, 0, 1, 1], [], []>} : vector<16x128xf32>, vector<128x128xf32>, vector<16x128xf32> -> vector<16x128xf32>
    %16 = vector.broadcast %5 : vector<1x128xf32> to vector<16x128xf32>
    %17 = arith.addf %15, %16 : vector<16x128xf32>
    %c0_20 = arith.constant 0 : index
    %c0_21 = arith.constant 0 : index
    %18 = vector.load %arg11[%c0_20, %c0_21] : memref<1x128xf32, #tpu.memory_space<vmem>>, vector<1x128xf32>
    %19 = vector.shape_cast %18 : vector<1x128xf32> to vector<1x1x1x128xf32>
    %c0_22 = arith.constant 0 : index
    %c0_23 = arith.constant 0 : index
    %20 = vector.load %arg12[%c0_22, %c0_23] : memref<1x128xf32, #tpu.memory_space<vmem>>, vector<1x128xf32>
    %21 = vector.shape_cast %20 : vector<1x128xf32> to vector<1x1x1x128xf32>
    %c0_24 = arith.constant 0 : index
    %c0_25 = arith.constant 0 : index
    %c0_26 = arith.constant 0 : index
    %22 = vector.load %arg2[%c0_24, %c0_25, %c0_26] : memref<2x8x8xf32, #tpu.memory_space<vmem>>, vector<2x8x8xf32>
    %23 = vector.shape_cast %22 : vector<2x8x8xf32> to vector<2x8x8x1xf32>
    %24 = vector.broadcast %23 : vector<2x8x8x1xf32> to vector<2x8x8x128xf32>
    %25 = vector.broadcast %19 : vector<1x1x1x128xf32> to vector<2x8x8x128xf32>
    %26 = arith.mulf %24, %25 : vector<2x8x8x128xf32>
    %27 = vector.broadcast %21 : vector<1x1x1x128xf32> to vector<2x8x8x128xf32>
    %28 = arith.addf %26, %27 : vector<2x8x8x128xf32>
    %cst_27 = arith.constant 0.000000e+00 : f32
    %29 = vector.broadcast %cst_27 : f32 to vector<2x8x8x128xf32>
    %30 = arith.maximumf %28, %29 : vector<2x8x8x128xf32>
    %cst_28 = arith.constant dense<0.000000e+00> : vector<2x8x128xf32>
    %31 = vector.multi_reduction <add>, %30, %cst_28 [1] : vector<2x8x8x128xf32> to vector<2x8x128xf32>
    %32 = vector.shape_cast %31 : vector<2x8x128xf32> to vector<16x128xf32>
    %cst_29 = arith.constant dense<0.000000e+00> : vector<16x128xf32>
    %33 = tpu.matmul %32, %8, %cst_29 {dimension_numbers = #tpu.dot_dimension_numbers<[1], [0], [0], [1], [0, 0, 1, 1], [], []>} : vector<16x128xf32>, vector<128x128xf32>, vector<16x128xf32> -> vector<16x128xf32>
    %34 = vector.broadcast %9 : vector<1x128xf32> to vector<16x128xf32>
    %35 = arith.addf %33, %34 : vector<16x128xf32>
    %36 = arith.addf %17, %35 : vector<16x128xf32>
    %37 = vector.broadcast %7 : vector<1x128xf32> to vector<16x128xf32>
    %38 = arith.addf %36, %37 : vector<16x128xf32>
    %c0_30 = arith.constant 0 : index
    %c0_31 = arith.constant 0 : index
    %c0_32 = arith.constant 0 : index
    %39 = vector.load %arg2[%c0_30, %c0_31, %c0_32] : memref<2x8x8xf32, #tpu.memory_space<vmem>>, vector<2x8x8xf32>
    %cst_33 = arith.constant 0.000000e+00 : f32
    %40 = vector.broadcast %cst_33 : f32 to vector<16x128xf32>
    %41 = arith.maximumf %38, %40 : vector<16x128xf32>
    %c0_i32 = arith.constant 0 : i32
    %42 = vector.shape_cast %41 : vector<16x128xf32> to vector<2x8x128xf32>
    "tpu.trace_start"() <{level = 10 : i32, message = "bij,bje->bie"}> : () -> ()
    %cst_34 = arith.constant dense<0.000000e+00> : vector<2x8x128xf32>
    %43 = tpu.matmul %39, %42, %cst_34 {dimension_numbers = #tpu.dot_dimension_numbers<[2], [1], [1], [2], [0, 0, 0, 1, 1, 2], [0], [0]>} : vector<2x8x8xf32>, vector<2x8x128xf32>, vector<2x8x128xf32> -> vector<2x8x128xf32>
    "tpu.trace_stop"() : () -> ()
    %44 = vector.shape_cast %43 : vector<2x8x128xf32> to vector<16x128xf32>
    %cst_35 = arith.constant dense<0.000000e+00> : vector<16x128xf32>
    %45 = tpu.matmul %44, %6, %cst_35 {dimension_numbers = #tpu.dot_dimension_numbers<[1], [0], [0], [1], [0, 0, 1, 1], [], []>} : vector<16x128xf32>, vector<128x128xf32>, vector<16x128xf32> -> vector<16x128xf32>
    %46 = arith.addf %38, %45 : vector<16x128xf32>
    %cst_36 = arith.constant 0.000000e+00 : f32
    %47 = vector.broadcast %cst_36 : f32 to vector<16x128xf32>
    %48 = arith.maximumf %46, %47 : vector<16x128xf32>
    %c1_i32 = arith.constant 1 : i32
    %49 = vector.shape_cast %48 : vector<16x128xf32> to vector<2x8x128xf32>
    "tpu.trace_start"() <{level = 10 : i32, message = "bij,bje->bie"}> : () -> ()
    %cst_37 = arith.constant dense<0.000000e+00> : vector<2x8x128xf32>
    %50 = tpu.matmul %39, %49, %cst_37 {dimension_numbers = #tpu.dot_dimension_numbers<[2], [1], [1], [2], [0, 0, 0, 1, 1, 2], [0], [0]>} : vector<2x8x8xf32>, vector<2x8x128xf32>, vector<2x8x128xf32> -> vector<2x8x128xf32>
    "tpu.trace_stop"() : () -> ()
    %51 = vector.shape_cast %50 : vector<2x8x128xf32> to vector<16x128xf32>
    %cst_38 = arith.constant dense<0.000000e+00> : vector<16x128xf32>
    %52 = tpu.matmul %51, %6, %cst_38 {dimension_numbers = #tpu.dot_dimension_numbers<[1], [0], [0], [1], [0, 0, 1, 1], [], []>} : vector<16x128xf32>, vector<128x128xf32>, vector<16x128xf32> -> vector<16x128xf32>
    %53 = arith.addf %38, %52 : vector<16x128xf32>
    %cst_39 = arith.constant 0.000000e+00 : f32
    %54 = vector.broadcast %cst_39 : f32 to vector<16x128xf32>
    %55 = arith.maximumf %53, %54 : vector<16x128xf32>
    %56 = vector.shape_cast %55 : vector<16x128xf32> to vector<2x8x128xf32>
    %c0_40 = arith.constant 0 : index
    %c0_41 = arith.constant 0 : index
    %c0_42 = arith.constant 0 : index
    %57 = vector.load %arg13[%c0_40, %c0_41, %c0_42] : memref<2x8x128xf32, #tpu.memory_space<vmem>>, vector<2x8x128xf32>
    tpu.vector_store %arg13[%c0_40, %c0_41, %c0_42], %56 {strides = array<i32>} : memref<2x8x128xf32, #tpu.memory_space<vmem>>, vector<2x8x128xf32>,
    return
  }
  func.func @transform_0(%arg0: i32) -> (i32, i32, i32) {
    %c0_i32 = arith.constant 0 : i32
    %c0_i32_0 = arith.constant 0 : i32
    %c0_i32_1 = arith.constant 0 : i32
    return %arg0, %c0_i32, %c0_i32_0 : i32, i32, i32
  }
  func.func @transform_1(%arg0: i32) -> (i32, i32, i32) {
    %c0_i32 = arith.constant 0 : i32
    %c0_i32_0 = arith.constant 0 : i32
    %c0_i32_1 = arith.constant 0 : i32
    return %arg0, %c0_i32, %c0_i32_0 : i32, i32, i32
  }
  func.func @transform_2(%arg0: i32) -> (i32, i32) {
    %c0_i32 = arith.constant 0 : i32
    %c0_i32_0 = arith.constant 0 : i32
    %c0_i32_1 = arith.constant 0 : i32
    return %c0_i32, %c0_i32_0 : i32, i32
  }
  func.func @transform_3(%arg0: i32) -> (i32, i32) {
    %c0_i32 = arith.constant 0 : i32
    %c0_i32_0 = arith.constant 0 : i32
    %c0_i32_1 = arith.constant 0 : i32
    return %c0_i32, %c0_i32_0 : i32, i32
  }
  func.func @transform_4(%arg0: i32) -> (i32, i32) {
    %c0_i32 = arith.constant 0 : i32
    %c0_i32_0 = arith.constant 0 : i32
    %c0_i32_1 = arith.constant 0 : i32
    return %c0_i32, %c0_i32_0 : i32, i32
  }
  func.func @transform_5(%arg0: i32) -> (i32, i32) {
    %c0_i32 = arith.constant 0 : i32
    %c0_i32_0 = arith.constant 0 : i32
    %c0_i32_1 = arith.constant 0 : i32
    return %c0_i32, %c0_i32_0 : i32, i32
  }
  func.func @transform_6(%arg0: i32) -> (i32, i32) {
    %c0_i32 = arith.constant 0 : i32
    %c0_i32_0 = arith.constant 0 : i32
    %c0_i32_1 = arith.constant 0 : i32
    return %c0_i32, %c0_i32_0 : i32, i32
  }
  func.func @transform_7(%arg0: i32) -> (i32, i32) {
    %c0_i32 = arith.constant 0 : i32
    %c0_i32_0 = arith.constant 0 : i32
    %c0_i32_1 = arith.constant 0 : i32
    return %c0_i32, %c0_i32_0 : i32, i32
  }
  func.func @transform_8(%arg0: i32) -> (i32, i32) {
    %c0_i32 = arith.constant 0 : i32
    %c0_i32_0 = arith.constant 0 : i32
    %c0_i32_1 = arith.constant 0 : i32
    return %c0_i32, %c0_i32_0 : i32, i32
  }
  func.func @transform_9(%arg0: i32) -> (i32, i32) {
    %c0_i32 = arith.constant 0 : i32
    %c0_i32_0 = arith.constant 0 : i32
    %c0_i32_1 = arith.constant 0 : i32
    return %c0_i32, %c0_i32_0 : i32, i32
  }
  func.func @transform_10(%arg0: i32) -> (i32, i32) {
    %c0_i32 = arith.constant 0 : i32
    %c0_i32_0 = arith.constant 0 : i32
    %c0_i32_1 = arith.constant 0 : i32
    return %c0_i32, %c0_i32_0 : i32, i32
  }
  func.func @transform_11(%arg0: i32) -> (i32, i32) {
    %c0_i32 = arith.constant 0 : i32
    %c0_i32_0 = arith.constant 0 : i32
    %c0_i32_1 = arith.constant 0 : i32
    return %c0_i32, %c0_i32_0 : i32, i32
  }
  func.func @transform_12(%arg0: i32) -> (i32, i32, i32) {
    %c0_i32 = arith.constant 0 : i32
    %c0_i32_0 = arith.constant 0 : i32
    %c0_i32_1 = arith.constant 0 : i32
    return %arg0, %c0_i32, %c0_i32_0 : i32, i32, i32
  }
}

</mosaic_0001>

<llo_original>
// kernel: tpu_custom_call.1
$region0: #{tpu_custom_call.1}
  #allocation0 [shape = 'u32[]', space=smem, size = 0x4, offset = 0x4, fixed_abs, tag = 'smem constant byte address 0x4 - core index']
  #allocation1 [shape = 'u32[72,128]{1,0:T(1,128)}', space=vmem, size = 0x9000, scoped, tag = 'internal scratch']
  %s0 = inlined_call_operand.vmem [shape: f32[2,8,4], index: 0, kind: input, shape index: {}]
  %s1 = inlined_call_operand.vmem [shape: f32[2,8,8], index: 1, kind: input, shape index: {}]
  %s2 = inlined_call_operand.vmem [shape: f32[4,128], index: 2, kind: input, shape index: {}]
  %s3 = inlined_call_operand.vmem [shape: f32[1,128], index: 3, kind: input, shape index: {}]
  %s4 = inlined_call_operand.hbm [shape: f32[128,128], index: 4, kind: input, shape index: {}]
  %s5 = inlined_call_operand.vmem [shape: f32[1,128], index: 5, kind: input, shape index: {}]
  %s6 = inlined_call_operand.hbm [shape: f32[128,128], index: 6, kind: input, shape index: {}]
  %s7 = inlined_call_operand.vmem [shape: f32[1,128], index: 7, kind: input, shape index: {}]
  %s8 = inlined_call_operand.hbm [shape: f32[128,128], index: 8, kind: input, shape index: {}]
  %s9 = inlined_call_operand.vmem [shape: f32[1,128], index: 9, kind: input, shape index: {}]
  %s10 = inlined_call_operand.vmem [shape: f32[1,128], index: 10, kind: input, shape index: {}]
  %s11 = inlined_call_operand.vmem [shape: f32[1,128], index: 11, kind: input, shape index: {}]
  %s12 = inlined_call_operand.hbm [shape: f32[2,8,128], index: 12, kind: output, shape index: {}]
  %s13 = sld [smem:[#allocation0]]
  $region70: #{tpu_custom_call.1} parent=0
    _
  %s15 = ssub.s32 1, %s13
  %s16 = scalar_select 0, %s15, %s13
  $region1: #{tpu_custom_call.1} parent=0
    #allocation2 [shape = 'u8[65536]{0}', space=vmem, size = 0x10000, scoped, tag = 'input window, operand 4, single buffered']
    #allocation3 [shape = 's32[1]{0}', space=sflag, size = 0x4, scoped, tag = 'scoped memory for tpu_custom_call.1']
    #allocation4 [shape = 's32[1]{0}', space=sflag, size = 0x4, scoped, tag = 'scoped memory for tpu_custom_call.1']
    #allocation5 [shape = 'u8[65536]{0}', space=vmem, size = 0x10000, scoped, tag = 'input window, operand 6, single buffered']
    #allocation6 [shape = 's32[1]{0}', space=sflag, size = 0x4, scoped, tag = 'scoped memory for tpu_custom_call.1']
    #allocation7 [shape = 'u8[65536]{0}', space=vmem, size = 0x10000, scoped, tag = 'input window, operand 8, single buffered']
    #allocation8 [shape = 'u8[8192]{0}', space=vmem, size = 0x2000, scoped, tag = 'output window, operand 0, single buffered']
    %17 = vsyncpa [#allocation3], 0
    %18 = vsyncpa [#allocation6], 0
    %19 = vsyncpa [#allocation4], 0
    // Predicated region
    $region2: #{tpu_custom_call.1} parent=1 // pred_check
      _
    $region3: #{tpu_custom_call.1} parent=1 // pred_check_branch
      %21 = sbr.rel (0) target = $region5
    $region4: #{tpu_custom_call.1} parent=1 // pred_region
      _
    $region5: #{tpu_custom_call.1} parent=1 // pred_fallthru
      _
    // Predicated region
    $region6: #{tpu_custom_call.1} parent=1 // pred_check
      _
    $region7: #{tpu_custom_call.1} parent=1 // pred_check_branch
      %23 = sbr.rel (0) target = $region9
    $region8: #{tpu_custom_call.1} parent=1 // pred_region
      _
    $region9: #{tpu_custom_call.1} parent=1 // pred_fallthru
      _
    // Predicated region
    $region10: #{tpu_custom_call.1} parent=1 // pred_check
      _
    $region11: #{tpu_custom_call.1} parent=1 // pred_check_branch
      %25 = sbr.rel (0) target = $region13
    $region12: #{tpu_custom_call.1} parent=1 // pred_region
      _
    $region13: #{tpu_custom_call.1} parent=1 // pred_fallthru
      _
    // Predicated region
    $region14: #{tpu_custom_call.1} parent=1 // pred_check
      _
    $region15: #{tpu_custom_call.1} parent=1 // pred_check_branch
      %27 = sbr.rel (0) target = $region17
    $region16: #{tpu_custom_call.1} parent=1 // pred_region
      _
    $region17: #{tpu_custom_call.1} parent=1 // pred_fallthru
      _
    // Predicated region
    $region18: #{tpu_custom_call.1} parent=1 // pred_check
      _
    $region19: #{tpu_custom_call.1} parent=1 // pred_check_branch
      %29 = sbr.rel (0) target = $region21
    $region20: #{tpu_custom_call.1} parent=1 // pred_region
      %31 = vsyncadd [#allocation3], 0
      %s32 = sshll.u32 %s4, 4
      %s33 = int_to_ptr.hbm [resolvable:$true] %s32
      %s34 = sshll.u32 [#allocation2], 4
      %s35 = int_to_ptr.vmem [resolvable:$true] %s34
      %40 = dma.hbm_to_vmem [thread:$0]  %s33, 2048, %s35, [#allocation3], 128, 128, 8
    $region21: #{tpu_custom_call.1} parent=1 // pred_fallthru
      _
    // Predicated region
    $region22: #{tpu_custom_call.1} parent=1 // pred_check
      _
    $region23: #{tpu_custom_call.1} parent=1 // pred_check_branch
      %42 = sbr.rel (0) target = $region25
    $region24: #{tpu_custom_call.1} parent=1 // pred_region
      _
    $region25: #{tpu_custom_call.1} parent=1 // pred_fallthru
      _
    // Predicated region
    $region26: #{tpu_custom_call.1} parent=1 // pred_check
      _
    $region27: #{tpu_custom_call.1} parent=1 // pred_check_branch
      %44 = sbr.rel (0) target = $region29
    $region28: #{tpu_custom_call.1} parent=1 // pred_region
      %46 = vsyncadd [#allocation6], 0
      %s47 = sshll.u32 %s6, 4
      %s48 = int_to_ptr.hbm [resolvable:$true] %s47
      %s49 = sshll.u32 [#allocation5], 4
      %s50 = int_to_ptr.vmem [resolvable:$true] %s49
      %55 = dma.hbm_to_vmem [thread:$0]  %s48, 2048, %s50, [#allocation6], 128, 128, 8
    $region29: #{tpu_custom_call.1} parent=1 // pred_fallthru
      _
    // Predicated region
    $region30: #{tpu_custom_call.1} parent=1 // pred_check
      _
    $region31: #{tpu_custom_call.1} parent=1 // pred_check_branch
      %57 = sbr.rel (0) target = $region33
    $region32: #{tpu_custom_call.1} parent=1 // pred_region
      _
    $region33: #{tpu_custom_call.1} parent=1 // pred_fallthru
      _
    // Predicated region
    $region34: #{tpu_custom_call.1} parent=1 // pred_check
      _
    $region35: #{tpu_custom_call.1} parent=1 // pred_check_branch
      %59 = sbr.rel (0) target = $region37
    $region36: #{tpu_custom_call.1} parent=1 // pred_region
      %61 = vsyncadd [#allocation6], 0
      %s62 = sshll.u32 %s8, 4
      %s63 = int_to_ptr.hbm [resolvable:$true] %s62
      %s64 = sshll.u32 [#allocation7], 4
      %s65 = int_to_ptr.vmem [resolvable:$true] %s64
      %70 = dma.hbm_to_vmem [thread:$0]  %s63, 2048, %s65, [#allocation6], 128, 128, 8
    $region37: #{tpu_custom_call.1} parent=1 // pred_fallthru
      _
    // Predicated region
    $region38: #{tpu_custom_call.1} parent=1 // pred_check
      _
    $region39: #{tpu_custom_call.1} parent=1 // pred_check_branch
      %72 = sbr.rel (0) target = $region41
    $region40: #{tpu_custom_call.1} parent=1 // pred_region
      _
    $region41: #{tpu_custom_call.1} parent=1 // pred_fallthru
      _
    // Predicated region
    $region42: #{tpu_custom_call.1} parent=1 // pred_check
      _
    $region43: #{tpu_custom_call.1} parent=1 // pred_check_branch
      %74 = sbr.rel (0) target = $region45
    $region44: #{tpu_custom_call.1} parent=1 // pred_region
      _
    $region45: #{tpu_custom_call.1} parent=1 // pred_fallthru
      _
    // Predicated region
    $region46: #{tpu_custom_call.1} parent=1 // pred_check
      _
    $region47: #{tpu_custom_call.1} parent=1 // pred_check_branch
      %76 = sbr.rel (0) target = $region49
    $region48: #{tpu_custom_call.1} parent=1 // pred_region
      _
    $region49: #{tpu_custom_call.1} parent=1 // pred_fallthru
      _
    // Predicated region
    $region50: #{tpu_custom_call.1} parent=1 // pred_check
      _
    $region51: #{tpu_custom_call.1} parent=1 // pred_check_branch
      %78 = sbr.rel (0) target = $region53
    $region52: #{tpu_custom_call.1} parent=1 // pred_region
      %80 = dma.done [#allocation3], 2048
    $region53: #{tpu_custom_call.1} parent=1 // pred_fallthru
      _
    // Predicated region
    $region54: #{tpu_custom_call.1} parent=1 // pred_check
      _
    $region55: #{tpu_custom_call.1} parent=1 // pred_check_branch
      %82 = sbr.rel (0) target = $region57
    $region56: #{tpu_custom_call.1} parent=1 // pred_region
      %84 = dma.done [#allocation6], 2048
    $region57: #{tpu_custom_call.1} parent=1 // pred_fallthru
      _
    // Predicated region
    $region58: #{tpu_custom_call.1} parent=1 // pred_check
      _
    $region59: #{tpu_custom_call.1} parent=1 // pred_check_branch
      %86 = sbr.rel (0) target = $region61
    $region60: #{tpu_custom_call.1} parent=1 // pred_region
      %88 = dma.done [#allocation6], 2048
    $region61: #{tpu_custom_call.1} parent=1 // pred_fallthru
      _
    %v89 = vld [vmem:[%s0] sm:$0xff]
    %v90 = vld [vmem:[%s0 + $0x8] sm:$0xff]
    %v91 = vld [vmem:[%s2] sm:$0xf]
    %v92 = vld [vmem:[%s3] sm:$0x1]
    %v93 = vld [vmem:[#allocation2] sm:$0xff]
    %v94 = vld [vmem:[#allocation2 + $0x8] sm:$0xff]
    %v95 = vld [vmem:[#allocation2 + $0x10] sm:$0xff]
    %v96 = vld [vmem:[#allocation2 + $0x18] sm:$0xff]
    %v97 = vld [vmem:[#allocation2 + $0x20] sm:$0xff]
    %v98 = vld [vmem:[#allocation2 + $0x28] sm:$0xff]
    %v99 = vld [vmem:[#allocation2 + $0x30] sm:$0xff]
    %v100 = vld [vmem:[#allocation2 + $0x38] sm:$0xff]
    %v101 = vld [vmem:[#allocation2 + $0x40] sm:$0xff]
    %v102 = vld [vmem:[#allocation2 + $0x48] sm:$0xff]
    %v103 = vld [vmem:[#allocation2 + $0x50] sm:$0xff]
    %v104 = vld [vmem:[#allocation2 + $0x58] sm:$0xff]
    %v105 = vld [vmem:[#allocation2 + $0x60] sm:$0xff]
    %v106 = vld [vmem:[#allocation2 + $0x68] sm:$0xff]
    %v107 = vld [vmem:[#allocation2 + $0x70] sm:$0xff]
    %v108 = vld [vmem:[#allocation2 + $0x78] sm:$0xff]
    %v109 = vld [vmem:[%s5] sm:$0x1]
    %v110 = vld [vmem:[#allocation5] sm:$0xff]
    %v111 = vld [vmem:[#allocation5 + $0x8] sm:$0xff]
    %v112 = vld [vmem:[#allocation5 + $0x10] sm:$0xff]
    %v113 = vld [vmem:[#allocation5 + $0x18] sm:$0xff]
    %v114 = vld [vmem:[#allocation5 + $0x20] sm:$0xff]
    %v115 = vld [vmem:[#allocation5 + $0x28] sm:$0xff]
    %v116 = vld [vmem:[#allocation5 + $0x30] sm:$0xff]
    %v117 = vld [vmem:[#allocation5 + $0x38] sm:$0xff]
    %v118 = vld [vmem:[#allocation5 + $0x40] sm:$0xff]
    %v119 = vld [vmem:[#allocation5 + $0x48] sm:$0xff]
    %v120 = vld [vmem:[#allocation5 + $0x50] sm:$0xff]
    %v121 = vld [vmem:[#allocation5 + $0x58] sm:$0xff]
    %v122 = vld [vmem:[#allocation5 + $0x60] sm:$0xff]
    %v123 = vld [vmem:[#allocation5 + $0x68] sm:$0xff]
    %v124 = vld [vmem:[#allocation5 + $0x70] sm:$0xff]
    %v125 = vld [vmem:[#allocation5 + $0x78] sm:$0xff]
    %v126 = vld [vmem:[%s7] sm:$0x1]
    %v127 = vld [vmem:[#allocation7] sm:$0xff]
    %v128 = vld [vmem:[#allocation7 + $0x8] sm:$0xff]
    %v129 = vld [vmem:[#allocation7 + $0x10] sm:$0xff]
    %v130 = vld [vmem:[#allocation7 + $0x18] sm:$0xff]
    %v131 = vld [vmem:[#allocation7 + $0x20] sm:$0xff]
    %v132 = vld [vmem:[#allocation7 + $0x28] sm:$0xff]
    %v133 = vld [vmem:[#allocation7 + $0x30] sm:$0xff]
    %v134 = vld [vmem:[#allocation7 + $0x38] sm:$0xff]
    %v135 = vld [vmem:[#allocation7 + $0x40] sm:$0xff]
    %v136 = vld [vmem:[#allocation7 + $0x48] sm:$0xff]
    %v137 = vld [vmem:[#allocation7 + $0x50] sm:$0xff]
    %v138 = vld [vmem:[#allocation7 + $0x58] sm:$0xff]
    %v139 = vld [vmem:[#allocation7 + $0x60] sm:$0xff]
    %v140 = vld [vmem:[#allocation7 + $0x68] sm:$0xff]
    %v141 = vld [vmem:[#allocation7 + $0x70] sm:$0xff]
    %v142 = vld [vmem:[#allocation7 + $0x78] sm:$0xff]
    %v143 = vld [vmem:[%s9] sm:$0x1]
    %v145 = vperm.slane %v92, 0
    %vm147 = vcmask 31744
    %v149 = vsel %vm147, %v89, 0
    %v152 = vsel %vm147, %v90, 0
    %vm154 = vcmask 1043456
    %v156 = vsel %vm154, %v91, 0
    %158 = vmatpush.msra.mxu0 0.0
    %159 = vmatpush.msra.mxu0 0.0
    %160 = vmatpush.msra.mxu0 0.0
    %161 = vmatpush.msra.mxu0 0.0
    %162 = vmatpush.msra.mxu0 0.0
    %163 = vmatpush.msra.mxu0 0.0
    %164 = vmatpush.msra.mxu0 0.0
    %165 = vmatpush.msra.mxu0 0.0
    %166 = vmatpush.msra.mxu0 0.0
    %167 = vmatpush.msra.mxu0 0.0
    %168 = vmatpush.msra.mxu0 0.0
    %169 = vmatpush.msra.mxu0 0.0
    %170 = vmatpush.msra.mxu0 0.0
    %171 = vmatpush.msra.mxu0 0.0
    %172 = vmatpush.msra.mxu0 0.0
    %173 = vmatpush.msra.mxu0 %v156
    %174 = vmatmul.f32.gmra.mxu0 %v149
    %v175 = vpop.f32.mrf.mxu0
    %v176 = vadd.f32 %v145, %v175
    %177 = vmatmul.f32.gmra.mxu0 %v152
    %v178 = vpop.f32.mrf.mxu0
    %v179 = vadd.f32 %v145, %v178
    %180 = vdwg.mxu0
    %v181 = vmax.f32 %v176, 0.0
    %v182 = vmax.f32 %v179, 0.0
    %v184 = vperm.slane %v109, 0
    %186 = vmatpush.msra.mxu0 %v108
    %187 = vmatpush.msra.mxu0 %v107
    %188 = vmatpush.msra.mxu0 %v106
    %189 = vmatpush.msra.mxu0 %v105
    %190 = vmatpush.msra.mxu0 %v104
    %191 = vmatpush.msra.mxu0 %v103
    %192 = vmatpush.msra.mxu0 %v102
    %193 = vmatpush.msra.mxu0 %v101
    %194 = vmatpush.msra.mxu0 %v100
    %195 = vmatpush.msra.mxu0 %v99
    %196 = vmatpush.msra.mxu0 %v98
    %197 = vmatpush.msra.mxu0 %v97
    %198 = vmatpush.msra.mxu0 %v96
    %199 = vmatpush.msra.mxu0 %v95
    %200 = vmatpush.msra.mxu0 %v94
    %201 = vmatpush.msra.mxu0 %v93
    %202 = vmatmul.f32.gmra.mxu0 %v181
    %v203 = vpop.f32.mrf.mxu0
    %v204 = vadd.f32 %v184, %v203
    %205 = vmatmul.f32.gmra.mxu0 %v182
    %v206 = vpop.f32.mrf.mxu0
    %v207 = vadd.f32 %v184, %v206
    %208 = vdwg.mxu0
    %v209 = vld [vmem:[%s10] sm:$0x1]
    %v210 = vld [vmem:[%s11] sm:$0x1]
    %v211 = vld [vmem:[%s1] sm:$0xff]
    %v212 = vld [vmem:[%s1 + $0x8] sm:$0xff]
    %v213 = vperm.slane %v211, 0
    %v214 = vlaneseq
    %v215 = vshrl.u32 %v214, 7
    %217 = vset.pattern.permute.xlu0 %v215
    %218 = vperm.xlu0 %217, %v213
    %v219 = vpop.permute.xlu0 %218
    %v220 = vperm.slane %v211, 1
    %v221 = vlaneseq
    %v222 = vshrl.u32 %v221, 7
    %224 = vset.pattern.permute.xlu0 %v222
    %225 = vperm.xlu0 %224, %v220
    %v226 = vpop.permute.xlu0 %225
    %v227 = vperm.slane %v211, 2
    %v228 = vlaneseq
    %v229 = vshrl.u32 %v228, 7
    %231 = vset.pattern.permute.xlu0 %v229
    %232 = vperm.xlu0 %231, %v227
    %v233 = vpop.permute.xlu0 %232
    %v234 = vperm.slane %v211, 3
    %v235 = vlaneseq
    %v236 = vshrl.u32 %v235, 7
    %238 = vset.pattern.permute.xlu0 %v236
    %239 = vperm.xlu0 %238, %v234
    %v240 = vpop.permute.xlu0 %239
    %v241 = vperm.slane %v211, 4
    %v242 = vlaneseq
    %v243 = vshrl.u32 %v242, 7
    %245 = vset.pattern.permute.xlu0 %v243
    %246 = vperm.xlu0 %245, %v241
    %v247 = vpop.permute.xlu0 %246
    %v248 = vperm.slane %v211, 5
    %v249 = vlaneseq
    %v250 = vshrl.u32 %v249, 7
    %252 = vset.pattern.permute.xlu0 %v250
    %253 = vperm.xlu0 %252, %v248
    %v254 = vpop.permute.xlu0 %253
    %v255 = vperm.slane %v211, 6
    %v256 = vlaneseq
    %v257 = vshrl.u32 %v256, 7
    %259 = vset.pattern.permute.xlu0 %v257
    %260 = vperm.xlu0 %259, %v255
    %v261 = vpop.permute.xlu0 %260
    %v262 = vperm.slane %v211, 7
    %v263 = vlaneseq
    %v264 = vshrl.u32 %v263, 7
    %266 = vset.pattern.permute.xlu0 %v264
    %267 = vperm.xlu0 %266, %v262
    %v268 = vpop.permute.xlu0 %267
    %v269 = vperm.slane %v212, 0
    %v270 = vlaneseq
    %v271 = vshrl.u32 %v270, 7
    %273 = vset.pattern.permute.xlu0 %v271
    %274 = vperm.xlu0 %273, %v269
    %v275 = vpop.permute.xlu0 %274
    %v276 = vperm.slane %v212, 1
    %v277 = vlaneseq
    %v278 = vshrl.u32 %v277, 7
    %280 = vset.pattern.permute.xlu0 %v278
    %281 = vperm.xlu0 %280, %v276
    %v282 = vpop.permute.xlu0 %281
    %v283 = vperm.slane %v212, 2
    %v284 = vlaneseq
    %v285 = vshrl.u32 %v284, 7
    %287 = vset.pattern.permute.xlu0 %v285
    %288 = vperm.xlu0 %287, %v283
    %v289 = vpop.permute.xlu0 %288
    %v290 = vperm.slane %v212, 3
    %v291 = vlaneseq
    %v292 = vshrl.u32 %v291, 7
    %294 = vset.pattern.permute.xlu0 %v292
    %295 = vperm.xlu0 %294, %v290
    %v296 = vpop.permute.xlu0 %295
    %v297 = vperm.slane %v212, 4
    %v298 = vlaneseq
    %v299 = vshrl.u32 %v298, 7
    %301 = vset.pattern.permute.xlu0 %v299
    %302 = vperm.xlu0 %301, %v297
    %v303 = vpop.permute.xlu0 %302
    %v304 = vperm.slane %v212, 5
    %v305 = vlaneseq
    %v306 = vshrl.u32 %v305, 7
    %308 = vset.pattern.permute.xlu0 %v306
    %309 = vperm.xlu0 %308, %v304
    %v310 = vpop.permute.xlu0 %309
    %v311 = vperm.slane %v212, 6
    %v312 = vlaneseq
    %v313 = vshrl.u32 %v312, 7
    %315 = vset.pattern.permute.xlu0 %v313
    %316 = vperm.xlu0 %315, %v311
    %v317 = vpop.permute.xlu0 %316
    %v318 = vperm.slane %v212, 7
    %v319 = vlaneseq
    %v320 = vshrl.u32 %v319, 7
    %322 = vset.pattern.permute.xlu0 %v320
    %323 = vperm.xlu0 %322, %v318
    %v324 = vpop.permute.xlu0 %323
    %v326 = vperm.slane %v209, 0
    %v328 = vmul.f32 %v219, %v326
    %v329 = vmul.f32 %v226, %v326
    %v330 = vmul.f32 %v233, %v326
    %v331 = vmul.f32 %v240, %v326
    %v332 = vmul.f32 %v247, %v326
    %v333 = vmul.f32 %v254, %v326
    %v334 = vmul.f32 %v261, %v326
    %v335 = vmul.f32 %v268, %v326
    %v336 = vmul.f32 %v275, %v326
    %v337 = vmul.f32 %v282, %v326
    %v338 = vmul.f32 %v289, %v326
    %v339 = vmul.f32 %v296, %v326
    %v340 = vmul.f32 %v303, %v326
    %v341 = vmul.f32 %v310, %v326
    %v342 = vmul.f32 %v317, %v326
    %v343 = vmul.f32 %v324, %v326
    %v345 = vperm.slane %v210, 0
    %v347 = vadd.f32 %v328, %v345
    %v348 = vadd.f32 %v329, %v345
    %v349 = vadd.f32 %v330, %v345
    %v350 = vadd.f32 %v331, %v345
    %v351 = vadd.f32 %v332, %v345
    %v352 = vadd.f32 %v333, %v345
    %v353 = vadd.f32 %v334, %v345
    %v354 = vadd.f32 %v335, %v345
    %v355 = vadd.f32 %v336, %v345
    %v356 = vadd.f32 %v337, %v345
    %v357 = vadd.f32 %v338, %v345
    %v358 = vadd.f32 %v339, %v345
    %v359 = vadd.f32 %v340, %v345
    %v360 = vadd.f32 %v341, %v345
    %v361 = vadd.f32 %v342, %v345
    %v362 = vadd.f32 %v343, %v345
    %v363 = vmax.f32 %v347, 0.0
    %v364 = vmax.f32 %v348, 0.0
    %v365 = vmax.f32 %v349, 0.0
    %v366 = vmax.f32 %v350, 0.0
    %v367 = vmax.f32 %v351, 0.0
    %v368 = vmax.f32 %v352, 0.0
    %v369 = vmax.f32 %v353, 0.0
    %v370 = vmax.f32 %v354, 0.0
    %v371 = vmax.f32 %v355, 0.0
    %v372 = vmax.f32 %v356, 0.0
    %v373 = vmax.f32 %v357, 0.0
    %v374 = vmax.f32 %v358, 0.0
    %v375 = vmax.f32 %v359, 0.0
    %v376 = vmax.f32 %v360, 0.0
    %v377 = vmax.f32 %v361, 0.0
    %v378 = vmax.f32 %v362, 0.0
    %v379 = vadd.f32 %v363, %v364
    %v380 = vadd.f32 %v379, %v365
    %v381 = vadd.f32 %v380, %v366
    %v382 = vadd.f32 %v381, %v367
    %v383 = vadd.f32 %v382, %v368
    %v384 = vadd.f32 %v383, %v369
    %v385 = vadd.f32 %v384, %v370
    %v386 = vadd.f32 %v371, %v372
    %v387 = vadd.f32 %v386, %v373
    %v388 = vadd.f32 %v387, %v374
    %v389 = vadd.f32 %v388, %v375
    %v390 = vadd.f32 %v389, %v376
    %v391 = vadd.f32 %v390, %v377
    %v392 = vadd.f32 %v391, %v378
    %v394 = vperm.slane %v143, 0
    %396 = vmatpush.msra.mxu0 %v142
    %397 = vmatpush.msra.mxu0 %v141
    %398 = vmatpush.msra.mxu0 %v140
    %399 = vmatpush.msra.mxu0 %v139
    %400 = vmatpush.msra.mxu0 %v138
    %401 = vmatpush.msra.mxu0 %v137
    %402 = vmatpush.msra.mxu0 %v136
    %403 = vmatpush.msra.mxu0 %v135
    %404 = vmatpush.msra.mxu0 %v134
    %405 = vmatpush.msra.mxu0 %v133
    %406 = vmatpush.msra.mxu0 %v132
    %407 = vmatpush.msra.mxu0 %v131
    %408 = vmatpush.msra.mxu0 %v130
    %409 = vmatpush.msra.mxu0 %v129
    %410 = vmatpush.msra.mxu0 %v128
    %411 = vmatpush.msra.mxu0 %v127
    %412 = vmatmul.f32.gmra.mxu0 %v385
    %v413 = vpop.f32.mrf.mxu0
    %v414 = vadd.f32 %v394, %v413
    %415 = vmatmul.f32.gmra.mxu0 %v392
    %v416 = vpop.f32.mrf.mxu0
    %v417 = vadd.f32 %v394, %v416
    %418 = vdwg.mxu0
    %v419 = vadd.f32 %v204, %v414
    %v420 = vadd.f32 %v207, %v417
    %v422 = vperm.slane %v126, 0
    %v424 = vadd.f32 %v419, %v422
    %v425 = vadd.f32 %v420, %v422
    %v426 = vmax.f32 %v424, 0.0
    %v427 = vmax.f32 %v425, 0.0
    %vm428 = vcmask 64512
    %v430 = vsel %vm428, %v211, 0
    %432 = vmatpush.msra.mxu0 0.0
    %433 = vmatpush.msra.mxu0 0.0
    %434 = vmatpush.msra.mxu0 0.0
    %435 = vmatpush.msra.mxu0 0.0
    %436 = vmatpush.msra.mxu0 0.0
    %437 = vmatpush.msra.mxu0 0.0
    %438 = vmatpush.msra.mxu0 0.0
    %439 = vmatpush.msra.mxu0 0.0
    %440 = vmatpush.msra.mxu0 0.0
    %441 = vmatpush.msra.mxu0 0.0
    %442 = vmatpush.msra.mxu0 0.0
    %443 = vmatpush.msra.mxu0 0.0
    %444 = vmatpush.msra.mxu0 0.0
    %445 = vmatpush.msra.mxu0 0.0
    %446 = vmatpush.msra.mxu0 0.0
    %447 = vmatpush.msra.mxu0 %v426
    %448 = vmatmul.f32.gmra.mxu0 %v430
    %v449 = vpop.f32.mrf.mxu0
    %v450 = vadd.f32 0.0, %v449
    %451 = vdwg.mxu0
    %v453 = vsel %vm428, %v212, 0
    %455 = vmatpush.msra.mxu0 0.0
    %456 = vmatpush.msra.mxu0 0.0
    %457 = vmatpush.msra.mxu0 0.0
    %458 = vmatpush.msra.mxu0 0.0
    %459 = vmatpush.msra.mxu0 0.0
    %460 = vmatpush.msra.mxu0 0.0
    %461 = vmatpush.msra.mxu0 0.0
    %462 = vmatpush.msra.mxu0 0.0
    %463 = vmatpush.msra.mxu0 0.0
    %464 = vmatpush.msra.mxu0 0.0
    %465 = vmatpush.msra.mxu0 0.0
    %466 = vmatpush.msra.mxu0 0.0
    %467 = vmatpush.msra.mxu0 0.0
    %468 = vmatpush.msra.mxu0 0.0
    %469 = vmatpush.msra.mxu0 0.0
    %470 = vmatpush.msra.mxu0 %v427
    %471 = vmatmul.f32.gmra.mxu0 %v453
    %v472 = vpop.f32.mrf.mxu0
    %v473 = vadd.f32 0.0, %v472
    %474 = vdwg.mxu0
    %475 = vmatpush.msra.mxu0 %v125
    %476 = vmatpush.msra.mxu0 %v124
    %477 = vmatpush.msra.mxu0 %v123
    %478 = vmatpush.msra.mxu0 %v122
    %479 = vmatpush.msra.mxu0 %v121
    %480 = vmatpush.msra.mxu0 %v120
    %481 = vmatpush.msra.mxu0 %v119
    %482 = vmatpush.msra.mxu0 %v118
    %483 = vmatpush.msra.mxu0 %v117
    %484 = vmatpush.msra.mxu0 %v116
    %485 = vmatpush.msra.mxu0 %v115
    %486 = vmatpush.msra.mxu0 %v114
    %487 = vmatpush.msra.mxu0 %v113
    %488 = vmatpush.msra.mxu0 %v112
    %489 = vmatpush.msra.mxu0 %v111
    %490 = vmatpush.msra.mxu0 %v110
    %491 = vmatmul.f32.gmra.mxu0 %v450
    %v492 = vpop.f32.mrf.mxu0
    %v493 = vadd.f32 0.0, %v492
    %494 = vmatmul.f32.gmra.mxu0 %v473
    %v495 = vpop.f32.mrf.mxu0
    %v496 = vadd.f32 0.0, %v495
    %497 = vdwg.mxu0
    %v498 = vadd.f32 %v424, %v493
    %v499 = vadd.f32 %v425, %v496
    %v500 = vmax.f32 %v498, 0.0
    %v501 = vmax.f32 %v499, 0.0
    %502 = vmatpush.msra.mxu0 0.0
    %503 = vmatpush.msra.mxu0 0.0
    %504 = vmatpush.msra.mxu0 0.0
    %505 = vmatpush.msra.mxu0 0.0
    %506 = vmatpush.msra.mxu0 0.0
    %507 = vmatpush.msra.mxu0 0.0
    %508 = vmatpush.msra.mxu0 0.0
    %509 = vmatpush.msra.mxu0 0.0
    %510 = vmatpush.msra.mxu0 0.0
    %511 = vmatpush.msra.mxu0 0.0
    %512 = vmatpush.msra.mxu0 0.0
    %513 = vmatpush.msra.mxu0 0.0
    %514 = vmatpush.msra.mxu0 0.0
    %515 = vmatpush.msra.mxu0 0.0
    %516 = vmatpush.msra.mxu0 0.0
    %517 = vmatpush.msra.mxu0 %v500
    %518 = vmatmul.f32.gmra.mxu0 %v430
    %v519 = vpop.f32.mrf.mxu0
    %v520 = vadd.f32 0.0, %v519
    %521 = vdwg.mxu0
    %522 = vmatpush.msra.mxu0 0.0
    %523 = vmatpush.msra.mxu0 0.0
    %524 = vmatpush.msra.mxu0 0.0
    %525 = vmatpush.msra.mxu0 0.0
    %526 = vmatpush.msra.mxu0 0.0
    %527 = vmatpush.msra.mxu0 0.0
    %528 = vmatpush.msra.mxu0 0.0
    %529 = vmatpush.msra.mxu0 0.0
    %530 = vmatpush.msra.mxu0 0.0
    %531 = vmatpush.msra.mxu0 0.0
    %532 = vmatpush.msra.mxu0 0.0
    %533 = vmatpush.msra.mxu0 0.0
    %534 = vmatpush.msra.mxu0 0.0
    %535 = vmatpush.msra.mxu0 0.0
    %536 = vmatpush.msra.mxu0 0.0
    %537 = vmatpush.msra.mxu0 %v501
    %538 = vmatmul.f32.gmra.mxu0 %v453
    %v539 = vpop.f32.mrf.mxu0
    %v540 = vadd.f32 0.0, %v539
    %541 = vdwg.mxu0
    %542 = vmatpush.msra.mxu0 %v125
    %543 = vmatpush.msra.mxu0 %v124
    %544 = vmatpush.msra.mxu0 %v123
    %545 = vmatpush.msra.mxu0 %v122
    %546 = vmatpush.msra.mxu0 %v121
    %547 = vmatpush.msra.mxu0 %v120
    %548 = vmatpush.msra.mxu0 %v119
    %549 = vmatpush.msra.mxu0 %v118
    %550 = vmatpush.msra.mxu0 %v117
    %551 = vmatpush.msra.mxu0 %v116
    %552 = vmatpush.msra.mxu0 %v115
    %553 = vmatpush.msra.mxu0 %v114
    %554 = vmatpush.msra.mxu0 %v113
    %555 = vmatpush.msra.mxu0 %v112
    %556 = vmatpush.msra.mxu0 %v111
    %557 = vmatpush.msra.mxu0 %v110
    %558 = vmatmul.f32.gmra.mxu0 %v520
    %v559 = vpop.f32.mrf.mxu0
    %v560 = vadd.f32 0.0, %v559
    %561 = vmatmul.f32.gmra.mxu0 %v540
    %v562 = vpop.f32.mrf.mxu0
    %v563 = vadd.f32 0.0, %v562
    %564 = vdwg.mxu0
    %v565 = vadd.f32 %v424, %v560
    %v566 = vadd.f32 %v425, %v563
    %v567 = vmax.f32 %v565, 0.0
    %v568 = vmax.f32 %v566, 0.0
    %569 = vst [vmem:[#allocation8] sm:$0xff] %v567
    %570 = vst [vmem:[#allocation8 + $0x8] sm:$0xff] %v568
    // Predicated region
    $region62: #{tpu_custom_call.1} parent=1 // pred_check
      _
    $region63: #{tpu_custom_call.1} parent=1 // pred_check_branch
      %572 = sbr.rel (0) target = $region65
    $region64: #{tpu_custom_call.1} parent=1 // pred_region
      %574 = vsyncadd [#allocation4], 0
      %s575 = sshll.u32 [#allocation8], 4
      %s576 = int_to_ptr.vmem [resolvable:$true] %s575
      %s577 = sshll.u32 %s12, 4
      %s578 = int_to_ptr.hbm [resolvable:$true] %s577
      %583 = dma.vmem_to_hbm [thread:$0]  %s576, 256, %s578, [#allocation4], 128, 128, 8
    $region65: #{tpu_custom_call.1} parent=1 // pred_fallthru
      _
    // Predicated region
    $region66: #{tpu_custom_call.1} parent=1 // pred_check
      _
    $region67: #{tpu_custom_call.1} parent=1 // pred_check_branch
      %585 = sbr.rel (0) target = $region69
    $region68: #{tpu_custom_call.1} parent=1 // pred_region
      %587 = dma.done [#allocation4], 256
    $region69: #{tpu_custom_call.1} parent=1 // pred_fallthru
      _
    %588 = vsyncpa [#allocation3], 1
    %589 = vsyncpa [#allocation6], 1
    %590 = vsyncpa [#allocation4], 1

</llo_original>
